<compile_context>
chip_gen: v6e
topology: v6e:2x2x1
jax: 0.10.0
libtpu: 0.0.40
codegen_flags: <defaults>
</compile_context>

<pallas_src>
import jax
import jax.numpy as jnp
from jax import lax
from jax.experimental import pallas as pl
from jax.experimental.pallas import tpu as pltpu

_OUT_W = 128                   # lane-dense output slab; only cols 0/1 are real
_MIN_DK_FOR_PALLAS = 256       # below this, a plain jnp contraction is faster
_W_RESIDENT_BUDGET = 8 << 20   # keep W resident in VMEM when it fits this


def _round_up(n, m):
    return ((n + m - 1) // m) * m


def _make_fxc1_kernel(tk, dk, resident_w, needs_mask):
    """Build the kernel body for a given (trace-time) tiling configuration."""

    def kernel(c_ref, w_ref, out_ref):
        # c_ref:   (tb, tk)                  tile of the (B, DK) input
        # w_ref:   (dk_w, 128) or (tk, 128)  resident / streamed weight slab
        # out_ref: (tb, 128)                 accumulator, resident across k
        k = pl.program_id(1)
        nk = pl.num_programs(1)

        @pl.when(k == 0)
        def _init():
            out_ref[...] = jnp.zeros_like(out_ref)

        if resident_w:
            # W lives in VMEM in full (DMA'd once); slice this step's rows.
            off = pl.multiple_of(k * tk, 128)
            w = w_ref[pl.ds(off, tk), :]
        else:
            w = w_ref[...]

        def _accum(c_tile):
            out_ref[...] += jnp.dot(c_tile, w,
                                    preferred_element_type=jnp.float32)

        if needs_mask:
            # DK is not a multiple of tk: the last reduction tile's VMEM
            # buffer holds garbage (possibly NaN) past column `dk`, so zero it
            # before it touches the MXU.  Full tiles skip the mask entirely.
            @pl.when(k < nk - 1)
            def _full_tile():
                _accum(c_ref[...])

            @pl.when(k == nk - 1)
            def _edge_tile():
                col = k * tk + lax.broadcasted_iota(jnp.int32, c_ref.shape, 1)
                _accum(jnp.where(col < dk, c_ref[...], 0.0))
        else:
            _accum(c_ref[...])

    return kernel


def fxc1_forward(c, x, factor, t=0.0, *, tb=1024, tk=2048, use_pallas=None,
                 w_resident_budget=_W_RESIDENT_BUDGET,
                 compute_dtype=jnp.float32):
    """c: (B, D, K); x: (D, K); factor: (K,); t: scalar or (D, 1).

    Returns (loss, general_loss), each of shape (B,), float32.
    """
    B, D, K = c.shape
    DK = D * K

    x = x.astype(jnp.float32)
    factor = factor.astype(jnp.float32)
    t = jnp.broadcast_to(jnp.asarray(t, jnp.float32), (D, 1))

    # Hoisted, B-independent terms: col 0 -> loss, col 1 -> general_loss.
    term_noise = factor[None, :] + (x - t) ** 2          # (D, K)
    term_gen = factor[None, :] + x ** 2                  # (D, K)

    if use_pallas is None:
        use_pallas = DK >= _MIN_DK_FOR_PALLAS

    if not use_pallas:
        # Tiny-DK fast path: the kernel's fixed cost + 128-wide output write
        # dominate here; a plain contraction is faster.
        w_small = jnp.stack([term_noise, term_gen], axis=0)           # (2,D,K)
        out = jnp.einsum("bdk,odk->bo", c.astype(jnp.float32), w_small,
                         precision=lax.Precision.HIGHEST)             # (B, 2)
        return out[:, 0], out[:, 1]

    # ---- tile selection -------------------------------------------------
    tk_eff = min(_round_up(tk, 128), _round_up(DK, 128))
    tb_eff = min(_round_up(tb, 8), _round_up(B, 8))
    if _round_up(B, 8) >= 16:
        # Give the "parallel" B axis at least two blocks so megacore chips
        # (v7x: 2 TensorCores) can actually shard it.
        tb_eff = min(tb_eff, _round_up(pl.cdiv(B, 2), 8))

    nb = pl.cdiv(B, tb_eff)
    nk = pl.cdiv(DK, tk_eff)
    dk_w = nk * tk_eff               # W rows padded to a tile multiple (tiny)
    needs_mask = (DK % tk_eff) != 0

    # ---- hoisted weight slab (small: only D*K real elements) -------------
    w = jnp.stack([term_noise.reshape(DK), term_gen.reshape(DK)], axis=-1)
    w_pad = jnp.pad(w, ((0, dk_w - DK), (0, _OUT_W - 2)))        # (dk_w, 128)
    w_pad = w_pad.astype(compute_dtype)

    # c is streamed as-is: NO padded copy of the dominant array in HBM.
    # (astype is a no-op when c already has compute_dtype, the f32 default.)
    c_flat = c.reshape(B, DK).astype(compute_dtype)

    itemsize = jnp.dtype(compute_dtype).itemsize
    resident_w = dk_w * _OUT_W * itemsize <= w_resident_budget

    if resident_w:
        w_spec = pl.BlockSpec((dk_w, _OUT_W), lambda i, k: (0, 0))
        w_stream_bytes = dk_w * _OUT_W * itemsize            # DMA'd once
        w_block_bytes = dk_w * _OUT_W * itemsize
    else:
        w_spec = pl.BlockSpec((tk_eff, _OUT_W), lambda i, k: (k, 0))
        w_stream_bytes = nb * dk_w * _OUT_W * itemsize       # per B tile
        w_block_bytes = tk_eff * _OUT_W * itemsize

    # VMEM: double-buffered c + W + resident output accumulator, plus headroom.
    vmem_need = 2 * (tb_eff * tk_eff * itemsize + w_block_bytes
                     + tb_eff * _OUT_W * 4)
    vmem_limit = max(vmem_need + (4 << 20), 16 << 20)

    kernel = _make_fxc1_kernel(tk_eff, DK, resident_w, needs_mask)

    out = pl.pallas_call(
        kernel,
        out_shape=jax.ShapeDtypeStruct((B, _OUT_W), jnp.float32),
        grid_spec=pltpu.PrefetchScalarGridSpec(
            num_scalar_prefetch=0,
            grid=(nb, nk),
            in_specs=[
                pl.BlockSpec((tb_eff, tk_eff), lambda i, k: (i, k)),
                w_spec,
            ],
            out_specs=pl.BlockSpec((tb_eff, _OUT_W), lambda i, k: (i, 0)),
        ),
        compiler_params=pltpu.CompilerParams(
            dimension_semantics=("parallel", "arbitrary"),
            vmem_limit_bytes=vmem_limit,
        ),
        cost_estimate=pl.CostEstimate(
            flops=2 * nb * tb_eff * dk_w * _OUT_W,
            transcendentals=0,
            bytes_accessed=B * DK * itemsize + w_stream_bytes + B * _OUT_W * 4,
        ),
    )(c_flat, w_pad)

    return out[:, 0], out[:, 1]


if __name__ == "__main__":
    fwd = jax.jit(
        fxc1_forward,
        static_argnames=("tb", "tk", "use_pallas", "w_resident_budget",
                         "compute_dtype"),
    )

    def reference(c, x, factor, t):
        term_noise = factor[None, :] + (x - t) ** 2
        term_gen = factor[None, :] + x ** 2
        loss = jnp.sum(c * term_noise[None], axis=(1, 2))
        gloss = jnp.sum(c * term_gen[None], axis=(1, 2))
        return loss, gloss

    def check(got, want, name):
        for g, w in zip(got, want):
            assert g.shape == w.shape, (name, g.shape, w.shape)
            err = float(jnp.max(jnp.abs(g - w)))
            assert jnp.allclose(g, w, atol=1e-4, rtol=1e-4), (name, err)

    key = jax.random.PRNGKey(0)

    # Case 1: module-default shapes (K=2, D=10, batch=2, noise=False), forced
    # through the Pallas kernel to exercise tiny-DK edge masking; also check
    # the auto-selected fast path on the same data.
    K, D, B = 2, 10, 2
    k1, k2, key = jax.random.split(key, 3)
    x = jax.random.normal(k1, (D, K), dtype=jnp.float32)
    factor = jnp.arange(0, K, dtype=jnp.float32) / K
    c = jax.random.normal(k2, (B, D, K), dtype=jnp.float32)
    t = jnp.zeros((D, 1), dtype=jnp.float32)                  # noise=False
    out1 = jax.block_until_ready(fwd(c, x, factor, t, use_pallas=True))
    check(out1, reference(c, x, factor, t), "case1_pallas")
    out1f = jax.block_until_ready(fwd(c, x, factor, t))       # auto -> jnp path
    check(out1f, reference(c, x, factor, t), "case1_fastpath")

    # Case 2: larger (still small) shapes with noise=True; auto-routes to the
    # Pallas kernel and exercises multi-step reduction, DK-edge masking,
    # B-edge partial blocks, resident W, and the 2-block megacore B split.
    K, D, B = 64, 40, 26
    k1, k2, k3, key = jax.random.split(key, 4)
    x = jax.random.normal(k1, (D, K), dtype=jnp.float32)
    factor = jnp.arange(0, K, dtype=jnp.float32) / K
    c = jax.random.normal(k2, (B, D, K), dtype=jnp.float32)
    t = jax.random.normal(k3, (D, 1), dtype=jnp.float32) / K  # noise=True
    out2 = jax.block_until_ready(fwd(c, x, factor, t))
    check(out2, reference(c, x, factor, t), "case2_pallas_resident_w")

    # Case 3: same data with W residency disabled -> streamed-W code path.
    out3 = jax.block_until_ready(fwd(c, x, factor, t, w_resident_budget=0))
    check(out3, reference(c, x, factor, t), "case3_pallas_streamed_w")

    print("KERNEL_OK")
</pallas_src>

<mosaic_0001>
module attributes {stable_mosaic.version = 11 : i64} {
  func.func @kernel(%arg0: i32, %arg1: i32, %arg2: memref<8x128xf32, #tpu.memory_space<vmem>>, %arg3: memref<128x128xf32, #tpu.memory_space<vmem>>, %arg4: memref<8x128xf32, #tpu.memory_space<vmem>>) attributes {dimension_semantics = [#tpu.dimension_semantics<parallel>, #tpu.dimension_semantics<arbitrary>], iteration_bounds = array<i64: 1, 1>, scalar_prefetch = 0 : i64, scratch_operands = 0 : i64, tpu.core_type = #tpu.core_type<tc>, window_params = [{transform_indices = @transform_0, window_bounds = array<i64: 8, 128>}, {pipeline_mode = #tpu.pipeline_mode<synchronous>, transform_indices = @transform_1, window_bounds = array<i64: 128, 128>}, {transform_indices = @transform_2, window_bounds = array<i64: 8, 128>}]} {
    %c0_i32 = arith.constant 0 : i32
    %0 = arith.cmpi eq, %arg1, %c0_i32 : i32
    %1 = arith.extui %0 : i1 to i32
    %c0_i32_0 = arith.constant 0 : i32
    %2 = arith.cmpi ne, %1, %c0_i32_0 : i32
    scf.if %2 {
      %cst = arith.constant 0.000000e+00 : f32
      %13 = vector.broadcast %cst : f32 to vector<8x128xf32>
      %c0_5 = arith.constant 0 : index
      %c0_6 = arith.constant 0 : index
      %14 = vector.load %arg4[%c0_5, %c0_6] : memref<8x128xf32, #tpu.memory_space<vmem>>, vector<8x128xf32>
      tpu.vector_store %arg4[%c0_5, %c0_6], %13 {strides = array<i32>} : memref<8x128xf32, #tpu.memory_space<vmem>>, vector<8x128xf32>,
    } else {
    }
    %c128_i32 = arith.constant 128 : i32
    %3 = arith.muli %arg1, %c128_i32 : i32
    %4 = tpu.assume_multiple %3, 128 : i32
    %5 = arith.index_cast %4 : i32 to index
    %c0 = arith.constant 0 : index
    %6 = vector.load %arg3[%5, %c0] : memref<128x128xf32, #tpu.memory_space<vmem>>, vector<128x128xf32>
    %c0_i32_1 = arith.constant 0 : i32
    %7 = arith.cmpi slt, %arg1, %c0_i32_1 : i32
    %8 = arith.extui %7 : i1 to i32
    %c0_i32_2 = arith.constant 0 : i32
    %9 = arith.cmpi ne, %8, %c0_i32_2 : i32
    scf.if %9 {
      %c0_5 = arith.constant 0 : index
      %c0_6 = arith.constant 0 : index
      %13 = vector.load %arg2[%c0_5, %c0_6] : memref<8x128xf32, #tpu.memory_space<vmem>>, vector<8x128xf32>
      %c0_7 = arith.constant 0 : index
      %c0_8 = arith.constant 0 : index
      %14 = vector.load %arg4[%c0_7, %c0_8] : memref<8x128xf32, #tpu.memory_space<vmem>>, vector<8x128xf32>
      %cst = arith.constant dense<0.000000e+00> : vector<8x128xf32>
      %15 = tpu.matmul %13, %6, %cst {dimension_numbers = #tpu.dot_dimension_numbers<[1], [0], [0], [1], [0, 0, 1, 1], [], []>} : vector<8x128xf32>, vector<128x128xf32>, vector<8x128xf32> -> vector<8x128xf32>
      %16 = arith.addf %14, %15 : vector<8x128xf32>
      %c0_9 = arith.constant 0 : index
      %c0_10 = arith.constant 0 : index
      %17 = vector.load %arg4[%c0_9, %c0_10] : memref<8x128xf32, #tpu.memory_space<vmem>>, vector<8x128xf32>
      tpu.vector_store %arg4[%c0_9, %c0_10], %16 {strides = array<i32>} : memref<8x128xf32, #tpu.memory_space<vmem>>, vector<8x128xf32>,
    } else {
    }
    %c0_i32_3 = arith.constant 0 : i32
    %10 = arith.cmpi eq, %arg1, %c0_i32_3 : i32
    %11 = arith.extui %10 : i1 to i32
    %c0_i32_4 = arith.constant 0 : i32
    %12 = arith.cmpi ne, %11, %c0_i32_4 : i32
    scf.if %12 {
      %c128_i32_5 = arith.constant 128 : i32
      %13 = arith.muli %arg1, %c128_i32_5 : i32
      %14 = tpu.iota {dimensions = array<i32: 1>} : vector<8x128xi32>
      %15 = vector.broadcast %13 : i32 to vector<8x128xi32>
      %16 = arith.addi %15, %14 : vector<8x128xi32>
      %c20_i32 = arith.constant 20 : i32
      %17 = vector.broadcast %c20_i32 : i32 to vector<8x128xi32>
      %18 = arith.cmpi slt, %16, %17 : vector<8x128xi32>
      %c0_6 = arith.constant 0 : index
      %c0_7 = arith.constant 0 : index
      %19 = vector.load %arg2[%c0_6, %c0_7] : memref<8x128xf32, #tpu.memory_space<vmem>>, vector<8x128xf32>
      %cst = arith.constant 0.000000e+00 : f32
      %20 = vector.broadcast %cst : f32 to vector<8x128xf32>
      %21 = arith.select %18, %19, %20 : vector<8x128xi1>, vector<8x128xf32>
      %c0_8 = arith.constant 0 : index
      %c0_9 = arith.constant 0 : index
      %22 = vector.load %arg4[%c0_8, %c0_9] : memref<8x128xf32, #tpu.memory_space<vmem>>, vector<8x128xf32>
      %cst_10 = arith.constant dense<0.000000e+00> : vector<8x128xf32>
      %23 = tpu.matmul %21, %6, %cst_10 {dimension_numbers = #tpu.dot_dimension_numbers<[1], [0], [0], [1], [0, 0, 1, 1], [], []>} : vector<8x128xf32>, vector<128x128xf32>, vector<8x128xf32> -> vector<8x128xf32>
      %24 = arith.addf %22, %23 : vector<8x128xf32>
      %c0_11 = arith.constant 0 : index
      %c0_12 = arith.constant 0 : index
      %25 = vector.load %arg4[%c0_11, %c0_12] : memref<8x128xf32, #tpu.memory_space<vmem>>, vector<8x128xf32>
      tpu.vector_store %arg4[%c0_11, %c0_12], %24 {strides = array<i32>} : memref<8x128xf32, #tpu.memory_space<vmem>>, vector<8x128xf32>,
    } else {
    }
    return
  }
  func.func @transform_0(%arg0: i32, %arg1: i32) -> (i32, i32) {
    %c0_i32 = arith.constant 0 : i32
    return %arg0, %arg1 : i32, i32
  }
  func.func @transform_1(%arg0: i32, %arg1: i32) -> (i32, i32) {
    %c0_i32 = arith.constant 0 : i32
    %c0_i32_0 = arith.constant 0 : i32
    %c0_i32_1 = arith.constant 0 : i32
    return %c0_i32, %c0_i32_0 : i32, i32
  }
  func.func @transform_2(%arg0: i32, %arg1: i32) -> (i32, i32) {
    %c0_i32 = arith.constant 0 : i32
    %c0_i32_0 = arith.constant 0 : i32
    return %arg0, %c0_i32 : i32, i32
  }
}

</mosaic_0001>

<llo_original>
// kernel: fxc1_forward.1
$region0: #{fxc1_forward.1}
  #allocation0 [shape = 'u32[]', space=smem, size = 0x4, offset = 0x4, fixed_abs, tag = 'smem constant byte address 0x4 - core index']
  #allocation1 [shape = 'u32[144,128]{1,0:T(1,128)}', space=vmem, size = 0x12000, scoped, tag = 'internal scratch']
  %s0 = inlined_call_operand.vmem [shape: f32[2,20], index: 0, kind: input, shape index: {}]
  %s1 = inlined_call_operand.vmem [shape: f32[128,128], index: 1, kind: input, shape index: {}]
  %s2 = inlined_call_operand.vmem [shape: f32[2,128], index: 2, kind: output, shape index: {}]
  %s3 = sld [smem:[#allocation0]]
  $region60: #{fxc1_forward.1} parent=0
    _
  %s5 = ssub.s32 1, %s3
  %s6 = scalar_select 0, %s5, %s3
  $region1: #{fxc1_forward.1} parent=0
    #allocation2 [shape = 'u8[4096]{0}', space=vmem, size = 0x1000, scoped, tag = 'output window, operand 0, single buffered']
    // Predicated region
    $region2: #{fxc1_forward.1} parent=1 // pred_check
      _
    $region3: #{fxc1_forward.1} parent=1 // pred_check_branch
      %8 = sbr.rel (0) target = $region5
    $region4: #{fxc1_forward.1} parent=1 // pred_region
      _
    $region5: #{fxc1_forward.1} parent=1 // pred_fallthru
      _
    // Predicated region
    $region6: #{fxc1_forward.1} parent=1 // pred_check
      _
    $region7: #{fxc1_forward.1} parent=1 // pred_check_branch
      %10 = sbr.rel (0) target = $region9
    $region8: #{fxc1_forward.1} parent=1 // pred_region
      _
    $region9: #{fxc1_forward.1} parent=1 // pred_fallthru
      _
    %p11 = scmp.eq.s32.totalorder 0, 0
    // Predicated region
    $region10: #{fxc1_forward.1} parent=1 // pred_check
      %p12 = pneg %p11
    $region11: #{fxc1_forward.1} parent=1 // pred_check_branch
      %14 = sbr.rel (%p12) target = $region13
    $region12: #{fxc1_forward.1} parent=1 // pred_region
      %15 = vst [vmem:[#allocation2] sm:$0xff] 0.0
    $region13: #{fxc1_forward.1} parent=1 // pred_fallthru
      _
    %s16 = smul.u32 0, 128
    %s17 = scalar_lea.vmem %s1, %s16
    %v18 = vld [vmem:[%s17] sm:$0xff]
    %v19 = vld [vmem:[%s17 + $0x8] sm:$0xff]
    %v20 = vld [vmem:[%s17 + $0x10] sm:$0xff]
    %v21 = vld [vmem:[%s17 + $0x18] sm:$0xff]
    %v22 = vld [vmem:[%s17 + $0x20] sm:$0xff]
    %v23 = vld [vmem:[%s17 + $0x28] sm:$0xff]
    %v24 = vld [vmem:[%s17 + $0x30] sm:$0xff]
    %v25 = vld [vmem:[%s17 + $0x38] sm:$0xff]
    %v26 = vld [vmem:[%s17 + $0x40] sm:$0xff]
    %v27 = vld [vmem:[%s17 + $0x48] sm:$0xff]
    %v28 = vld [vmem:[%s17 + $0x50] sm:$0xff]
    %v29 = vld [vmem:[%s17 + $0x58] sm:$0xff]
    %v30 = vld [vmem:[%s17 + $0x60] sm:$0xff]
    %v31 = vld [vmem:[%s17 + $0x68] sm:$0xff]
    %v32 = vld [vmem:[%s17 + $0x70] sm:$0xff]
    %v33 = vld [vmem:[%s17 + $0x78] sm:$0xff]
    %p34 = scmp.lt.s32.totalorder 0, 0
    // Predicated region
    $region14: #{fxc1_forward.1} parent=1 // pred_check
      %p35 = pneg %p34
    $region15: #{fxc1_forward.1} parent=1 // pred_check_branch
      %37 = sbr.rel (%p35) target = $region17
    $region16: #{fxc1_forward.1} parent=1 // pred_region
      %v38 = vld [vmem:[%s0] sm:$0xff]
      %v39 = vld [vmem:[#allocation2] sm:$0xff]
      %40 = vmatprep.subr.mxu0 0.0
      %41 = vmatpush1.msra.mxu0 %v33
      %42 = vmatprep.subr.mxu0 0.0
      %43 = vmatpush1.msra.mxu0 %v32
      %44 = vmatprep.subr.mxu0 0.0
      %45 = vmatpush1.msra.mxu0 %v31
      %46 = vmatprep.subr.mxu0 0.0
      %47 = vmatpush1.msra.mxu0 %v30
      %48 = vmatprep.subr.mxu0 0.0
      %49 = vmatpush1.msra.mxu0 %v29
      %50 = vmatprep.subr.mxu0 0.0
      %51 = vmatpush1.msra.mxu0 %v28
      %52 = vmatprep.subr.mxu0 0.0
      %53 = vmatpush1.msra.mxu0 %v27
      %54 = vmatprep.subr.mxu0 0.0
      %55 = vmatpush1.msra.mxu0 %v26
      %56 = vmatprep.subr.mxu0 0.0
      %57 = vmatpush1.msra.mxu0 %v25
      %58 = vmatprep.subr.mxu0 0.0
      %59 = vmatpush1.msra.mxu0 %v24
      %60 = vmatprep.subr.mxu0 0.0
      %61 = vmatpush1.msra.mxu0 %v23
      %62 = vmatprep.subr.mxu0 0.0
      %63 = vmatpush1.msra.mxu0 %v22
      %64 = vmatprep.subr.mxu0 0.0
      %65 = vmatpush1.msra.mxu0 %v21
      %66 = vmatprep.subr.mxu0 0.0
      %67 = vmatpush1.msra.mxu0 %v20
      %68 = vmatprep.subr.mxu0 0.0
      %69 = vmatpush1.msra.mxu0 %v19
      %70 = vmatprep.subr.mxu0 0.0
      %71 = vmatpush1.msra.mxu0 %v18
      %72 = vmatprep.subr.mxu0 0.0
      %73 = vmatpush2.msra.mxu0 0.0
      %74 = vmatprep.subr.mxu0 0.0
      %75 = vmatpush2.msra.mxu0 0.0
      %76 = vmatprep.subr.mxu0 0.0
      %77 = vmatpush2.msra.mxu0 0.0
      %78 = vmatprep.subr.mxu0 0.0
      %79 = vmatpush2.msra.mxu0 0.0
      %80 = vmatprep.subr.mxu0 0.0
      %81 = vmatpush2.msra.mxu0 0.0
      %82 = vmatprep.subr.mxu0 0.0
      %83 = vmatpush2.msra.mxu0 0.0
      %84 = vmatprep.subr.mxu0 0.0
      %85 = vmatpush2.msra.mxu0 0.0
      %86 = vmatprep.subr.mxu0 0.0
      %87 = vmatpush2.msra.mxu0 0.0
      %88 = vmatprep.subr.mxu0 0.0
      %89 = vmatpush2.msra.mxu0 0.0
      %90 = vmatprep.subr.mxu0 0.0
      %91 = vmatpush2.msra.mxu0 0.0
      %92 = vmatprep.subr.mxu0 0.0
      %93 = vmatpush2.msra.mxu0 0.0
      %94 = vmatprep.subr.mxu0 0.0
      %95 = vmatpush2.msra.mxu0 0.0
      %96 = vmatprep.subr.mxu0 0.0
      %97 = vmatpush2.msra.mxu0 0.0
      %98 = vmatprep.subr.mxu0 0.0
      %99 = vmatpush2.msra.mxu0 0.0
      %100 = vmatprep.subr.mxu0 0.0
      %101 = vmatpush2.msra.mxu0 0.0
      %102 = vmatprep.subr.mxu0 0.0
      %103 = vmatpush2.msra.mxu0 0.0
      %104 = vmatprep.mubr.f32.mxu0 0.0
      %105 = vmatmul.mubr.f32.gmra.mxu0 %v38
      %v106 = vpop.f32.mrf.mxu0
      %v107 = vadd.f32 0.0, %v106
      %v108 = vpop.f32.mrf.mxu0
      %109 = vdwg.mxu0
      %v110 = vadd.f32 %v39, %v107
      %111 = vst [vmem:[#allocation2] sm:$0xff] %v110
    $region17: #{fxc1_forward.1} parent=1 // pred_fallthru
      _
    // Predicated region
    $region18: #{fxc1_forward.1} parent=1 // pred_check
      %p112 = pneg %p11
    $region19: #{fxc1_forward.1} parent=1 // pred_check_branch
      %114 = sbr.rel (%p112) target = $region21
    $region20: #{fxc1_forward.1} parent=1 // pred_region
      %v115 = vlaneseq
      %v116 = vand.u32 %v115, 127
      %v117 = vstv %s16
      %v118 = vadd.s32 %v117, %v116
      %vm119 = vcmp.lt.s32.totalorder %v118, 20
      %v120 = vld [vmem:[%s0] sm:$0xff]
      %v121 = vsel %vm119, %v120, 0.0
      %v122 = vld [vmem:[#allocation2] sm:$0xff]
      %123 = vmatprep.subr.mxu0 0.0
      %124 = vmatpush1.msra.mxu0 %v33
      %125 = vmatprep.subr.mxu0 0.0
      %126 = vmatpush1.msra.mxu0 %v32
      %127 = vmatprep.subr.mxu0 0.0
      %128 = vmatpush1.msra.mxu0 %v31
      %129 = vmatprep.subr.mxu0 0.0
      %130 = vmatpush1.msra.mxu0 %v30
      %131 = vmatprep.subr.mxu0 0.0
      %132 = vmatpush1.msra.mxu0 %v29
      %133 = vmatprep.subr.mxu0 0.0
      %134 = vmatpush1.msra.mxu0 %v28
      %135 = vmatprep.subr.mxu0 0.0
      %136 = vmatpush1.msra.mxu0 %v27
      %137 = vmatprep.subr.mxu0 0.0
      %138 = vmatpush1.msra.mxu0 %v26
      %139 = vmatprep.subr.mxu0 0.0
      %140 = vmatpush1.msra.mxu0 %v25
      %141 = vmatprep.subr.mxu0 0.0
      %142 = vmatpush1.msra.mxu0 %v24
      %143 = vmatprep.subr.mxu0 0.0
      %144 = vmatpush1.msra.mxu0 %v23
      %145 = vmatprep.subr.mxu0 0.0
      %146 = vmatpush1.msra.mxu0 %v22
      %147 = vmatprep.subr.mxu0 0.0
      %148 = vmatpush1.msra.mxu0 %v21
      %149 = vmatprep.subr.mxu0 0.0
      %150 = vmatpush1.msra.mxu0 %v20
      %151 = vmatprep.subr.mxu0 0.0
      %152 = vmatpush1.msra.mxu0 %v19
      %153 = vmatprep.subr.mxu0 0.0
      %154 = vmatpush1.msra.mxu0 %v18
      %155 = vmatprep.subr.mxu0 0.0
      %156 = vmatpush2.msra.mxu0 0.0
      %157 = vmatprep.subr.mxu0 0.0
      %158 = vmatpush2.msra.mxu0 0.0
      %159 = vmatprep.subr.mxu0 0.0
      %160 = vmatpush2.msra.mxu0 0.0
      %161 = vmatprep.subr.mxu0 0.0
      %162 = vmatpush2.msra.mxu0 0.0
      %163 = vmatprep.subr.mxu0 0.0
      %164 = vmatpush2.msra.mxu0 0.0
      %165 = vmatprep.subr.mxu0 0.0
      %166 = vmatpush2.msra.mxu0 0.0
      %167 = vmatprep.subr.mxu0 0.0
      %168 = vmatpush2.msra.mxu0 0.0
      %169 = vmatprep.subr.mxu0 0.0
      %170 = vmatpush2.msra.mxu0 0.0
      %171 = vmatprep.subr.mxu0 0.0
      %172 = vmatpush2.msra.mxu0 0.0
      %173 = vmatprep.subr.mxu0 0.0
      %174 = vmatpush2.msra.mxu0 0.0
      %175 = vmatprep.subr.mxu0 0.0
      %176 = vmatpush2.msra.mxu0 0.0
      %177 = vmatprep.subr.mxu0 0.0
      %178 = vmatpush2.msra.mxu0 0.0
      %179 = vmatprep.subr.mxu0 0.0
      %180 = vmatpush2.msra.mxu0 0.0
      %181 = vmatprep.subr.mxu0 0.0
      %182 = vmatpush2.msra.mxu0 0.0
      %183 = vmatprep.subr.mxu0 0.0
      %184 = vmatpush2.msra.mxu0 0.0
      %185 = vmatprep.subr.mxu0 0.0
      %186 = vmatpush2.msra.mxu0 0.0
      %187 = vmatprep.mubr.f32.mxu0 0.0
      %188 = vmatmul.mubr.f32.gmra.mxu0 %v121
      %v189 = vpop.f32.mrf.mxu0
      %v190 = vadd.f32 0.0, %v189
      %v191 = vpop.f32.mrf.mxu0
      %192 = vdwg.mxu0
      %v193 = vadd.f32 %v122, %v190
      %194 = vst [vmem:[#allocation2] sm:$0xff] %v193
    $region21: #{fxc1_forward.1} parent=1 // pred_fallthru
      _
    // Predicated region
    $region22: #{fxc1_forward.1} parent=1 // pred_check
      _
    $region23: #{fxc1_forward.1} parent=1 // pred_check_branch
      %196 = sbr.rel (0) target = $region25
    $region24: #{fxc1_forward.1} parent=1 // pred_region
      // Predicated region
      $region26: #{fxc1_forward.1} parent=24 // pred_check
        _
      $region27: #{fxc1_forward.1} parent=24 // pred_check_branch
        %198 = sbr.rel (0) target = $region29
      $region28: #{fxc1_forward.1} parent=24 // pred_region
        // Predicated region
        $region30: #{fxc1_forward.1} parent=28 // pred_check
          _
        $region31: #{fxc1_forward.1} parent=28 // pred_check_branch
          %200 = sbr.rel target = $region33
        $region32: #{fxc1_forward.1} parent=28 // pred_region
          // Predicated region
          $region45: #{fxc1_forward.1} parent=32 // pred_check
            _
          $region46: #{fxc1_forward.1} parent=32 // pred_check_branch
            %216 = sbr.rel (0) target = $region48
          $region47: #{fxc1_forward.1} parent=32 // pred_region
            %s218 = ssub.s32 4, 1
            loop: start=0, step=1, limit=1
            $region49: #{fxc1_forward.1} parent=47 // loop_pre_header
              _
            $region50: #{fxc1_forward.1} parent=47 // loop_header
              %s220 = sphi 0, %s224
              %p221 = scmp.ge.s32.totalorder %s220, 1
              %s225 = sphi [#allocation2], [#allocation2]
              %s226 = sphi %s2, %s2
            $region51: #{fxc1_forward.1} parent=47 // loop_header_branch
              %223 = sbr.rel (%p221) target = $region55
            $region52: #{fxc1_forward.1} parent=47 // loop_body
              %v227 = vld [vmem:[%s225] sm:%s218]
              %228 = vst [vmem:[%s226] sm:%s218] %v227
            $region53: #{fxc1_forward.1} parent=47 // loop_footer
              %s224 = sadd.s32 1, %s220
            $region54: #{fxc1_forward.1} parent=47 // loop_footer_branch
              %219 = sbr.rel target = $region50
            $region55: #{fxc1_forward.1} parent=47 // loop_exit
              _
          $region48: #{fxc1_forward.1} parent=32 // pred_fallthru
            _
        $region33: #{fxc1_forward.1} parent=28 // pred_fallthru
          _
        // Predicated region
        $region34: #{fxc1_forward.1} parent=28 // pred_check
          _
        $region35: #{fxc1_forward.1} parent=28 // pred_check_branch
          %202 = sbr.rel (0) target = $region37
        $region36: #{fxc1_forward.1} parent=28 // pred_region
          %s204 = ssub.s32 4, 1
          loop: start=0, step=1, limit=1
          $region38: #{fxc1_forward.1} parent=36 // loop_pre_header
            _
          $region39: #{fxc1_forward.1} parent=36 // loop_header
            %s206 = sphi 0, %s210
            %p207 = scmp.ge.s32.totalorder %s206, 1
            %s211 = sphi [#allocation2], [#allocation2]
            %s212 = sphi %s2, %s2
          $region40: #{fxc1_forward.1} parent=36 // loop_header_branch
            %209 = sbr.rel (%p207) target = $region44
          $region41: #{fxc1_forward.1} parent=36 // loop_body
            %v213 = vld [vmem:[%s211] sm:%s204]
            %214 = vst [vmem:[%s212] sm:%s204] %v213
          $region42: #{fxc1_forward.1} parent=36 // loop_footer
            %s210 = sadd.s32 1, %s206
          $region43: #{fxc1_forward.1} parent=36 // loop_footer_branch
            %205 = sbr.rel target = $region39
          $region44: #{fxc1_forward.1} parent=36 // loop_exit
            _
        $region37: #{fxc1_forward.1} parent=28 // pred_fallthru
          _
      $region29: #{fxc1_forward.1} parent=24 // pred_fallthru
        _
      %229 = vnop
    $region25: #{fxc1_forward.1} parent=1 // pred_fallthru
      _
    // Predicated region
    $region56: #{fxc1_forward.1} parent=1 // pred_check
      _
    $region57: #{fxc1_forward.1} parent=1 // pred_check_branch
      %231 = sbr.rel (0) target = $region59
    $region58: #{fxc1_forward.1} parent=1 // pred_region
      _
    $region59: #{fxc1_forward.1} parent=1 // pred_fallthru
      _

</llo_original>
